<compile_context>
chip_gen: v7x
topology: tpu7x:2x2x1
jax: 0.10.0
libtpu: 0.0.40
codegen_flags: <defaults>
</compile_context>

<pallas_src>
import jax
import jax.numpy as jnp
from jax.experimental import pallas as pl


def _make_permute_kernel(num_batches):
    """Kernel: permute the joint axis of every batch via a one-hot matmul."""

    def kernel(p_ref, x_ref, o_ref):
        # p_ref: (J, J) one-hot permutation matrix, P[j, perm[j]] = 1.
        # x_ref: (N, J, C) full input slab, resident in VMEM.
        # o_ref: (N, J, C) full output slab in VMEM (one dense writeback DMA).
        p = p_ref[...]
        for b in range(num_batches):  # static unroll; N is small.
            xb = x_ref[b]  # (J, C) tile.
            # One-hot matmul == exact row gather: (P @ xb)[j, :] = xb[perm[j], :].
            o_ref[b] = jnp.dot(
                p, xb.astype(jnp.float32), preferred_element_type=jnp.float32
            ).astype(o_ref.dtype)

    return kernel


def graph_non_local_forward(x, grouped_order, restored_order):
    """out[b, j, :] = x[b, grouped_order[restored_order[j]], :]"""
    N, J, C = x.shape
    grouped_order = jnp.asarray(grouped_order, dtype=jnp.int32)
    restored_order = jnp.asarray(restored_order, dtype=jnp.int32)

    # Compose the two gathers once in the wrapper (tiny JAX gather), then
    # express the composed permutation as a one-hot matrix so the in-kernel
    # gather is a single vectorized MXU matmul per batch.
    perm = grouped_order[restored_order]                         # (J,)
    p_onehot = (perm[:, None] == jnp.arange(J, dtype=jnp.int32)[None, :])
    p_onehot = p_onehot.astype(jnp.float32)                      # (J, J)

    kernel = _make_permute_kernel(N)

    out = pl.pallas_call(
        kernel,
        out_shape=jax.ShapeDtypeStruct((N, J, C), x.dtype),
        grid=(1,),  # single step: whole problem is a few KiB, pipelining buys nothing
        in_specs=[
            pl.BlockSpec((J, J), lambda i: (0, 0)),        # full-array block
            pl.BlockSpec((N, J, C), lambda i: (0, 0, 0)),  # full-array block
        ],
        out_specs=pl.BlockSpec((N, J, C), lambda i: (0, 0, 0)),
    )(p_onehot, x)

    return out


if __name__ == "__main__":
    key = jax.random.PRNGKey(0)
    k_x, k_g, k_r = jax.random.split(key, 3)

    # Small shapes consistent with the module: batch=2, joints=16, hid_dim=32.
    N, J, C = 2, 16, 32
    x = jax.random.normal(k_x, (N, J, C), dtype=jnp.float32)

    # Deterministic permutations (the module's __init__ just stores these).
    grouped_order = jax.random.permutation(k_g, jnp.arange(J, dtype=jnp.int32))
    restored_order = jax.random.permutation(k_r, jnp.arange(J, dtype=jnp.int32))

    out = graph_non_local_forward(x, grouped_order, restored_order)
    out = jax.block_until_ready(out)

    # Pure-JAX reference mirroring the PyTorch forward exactly.
    ref = x[:, grouped_order, :]
    ref = ref[:, restored_order, :]

    assert out.shape == ref.shape and out.dtype == ref.dtype
    assert jnp.allclose(out, ref), "Pallas permute does not match reference"

    print("KERNEL_OK")
</pallas_src>

<mosaic_0001>
module attributes {stable_mosaic.version = 11 : i64} {
  func.func @kernel(%arg0: i32, %arg1: memref<16x16xf32, #tpu.memory_space<vmem>>, %arg2: memref<2x16x32xf32, #tpu.memory_space<vmem>>, %arg3: memref<2x16x32xf32, #tpu.memory_space<vmem>>) attributes {dimension_semantics = [#tpu.dimension_semantics<arbitrary>], iteration_bounds = array<i64: 1>, scalar_prefetch = 0 : i64, scratch_operands = 0 : i64, tpu.core_type = #tpu.core_type<tc>, window_params = [{pipeline_mode = #tpu.pipeline_mode<synchronous>, transform_indices = @transform_0, window_bounds = array<i64: 16, 16>}, {pipeline_mode = #tpu.pipeline_mode<synchronous>, transform_indices = @transform_1, window_bounds = array<i64: 2, 16, 32>}, {pipeline_mode = #tpu.pipeline_mode<synchronous>, transform_indices = @transform_2, window_bounds = array<i64: 2, 16, 32>}]} {
    %c0 = arith.constant 0 : index
    %c0_0 = arith.constant 0 : index
    %0 = vector.load %arg1[%c0, %c0_0] : memref<16x16xf32, #tpu.memory_space<vmem>>, vector<16x16xf32>
    %c0_1 = arith.constant 0 : index
    %c0_2 = arith.constant 0 : index
    %c0_3 = arith.constant 0 : index
    %1 = vector.load %arg2[%c0_1, %c0_2, %c0_3] : memref<2x16x32xf32, #tpu.memory_space<vmem>>, vector<1x16x32xf32>
    %2 = vector.shape_cast %1 : vector<1x16x32xf32> to vector<16x32xf32>
    %cst = arith.constant dense<0.000000e+00> : vector<16x32xf32>
    %3 = tpu.matmul %0, %2, %cst {dimension_numbers = #tpu.dot_dimension_numbers<[1], [0], [0], [1], [0, 0, 1, 1], [], []>} : vector<16x16xf32>, vector<16x32xf32>, vector<16x32xf32> -> vector<16x32xf32>
    %c0_4 = arith.constant 0 : index
    %c0_5 = arith.constant 0 : index
    %c0_6 = arith.constant 0 : index
    %4 = vector.load %arg3[%c0_4, %c0_5, %c0_6] : memref<2x16x32xf32, #tpu.memory_space<vmem>>, vector<1x16x32xf32>
    %5 = vector.shape_cast %4 : vector<1x16x32xf32> to vector<16x32xf32>
    %6 = vector.shape_cast %3 : vector<16x32xf32> to vector<1x16x32xf32>
    tpu.vector_store %arg3[%c0_4, %c0_5, %c0_6], %6 {strides = array<i32>} : memref<2x16x32xf32, #tpu.memory_space<vmem>>, vector<1x16x32xf32>,
    %c1 = arith.constant 1 : index
    %c0_7 = arith.constant 0 : index
    %c0_8 = arith.constant 0 : index
    %7 = vector.load %arg2[%c1, %c0_7, %c0_8] : memref<2x16x32xf32, #tpu.memory_space<vmem>>, vector<1x16x32xf32>
    %8 = vector.shape_cast %7 : vector<1x16x32xf32> to vector<16x32xf32>
    %cst_9 = arith.constant dense<0.000000e+00> : vector<16x32xf32>
    %9 = tpu.matmul %0, %8, %cst_9 {dimension_numbers = #tpu.dot_dimension_numbers<[1], [0], [0], [1], [0, 0, 1, 1], [], []>} : vector<16x16xf32>, vector<16x32xf32>, vector<16x32xf32> -> vector<16x32xf32>
    %c1_10 = arith.constant 1 : index
    %c0_11 = arith.constant 0 : index
    %c0_12 = arith.constant 0 : index
    %10 = vector.load %arg3[%c1_10, %c0_11, %c0_12] : memref<2x16x32xf32, #tpu.memory_space<vmem>>, vector<1x16x32xf32>
    %11 = vector.shape_cast %10 : vector<1x16x32xf32> to vector<16x32xf32>
    %12 = vector.shape_cast %9 : vector<16x32xf32> to vector<1x16x32xf32>
    tpu.vector_store %arg3[%c1_10, %c0_11, %c0_12], %12 {strides = array<i32>} : memref<2x16x32xf32, #tpu.memory_space<vmem>>, vector<1x16x32xf32>,
    return
  }
  func.func @transform_0(%arg0: i32) -> (i32, i32) {
    %c0_i32 = arith.constant 0 : i32
    %c0_i32_0 = arith.constant 0 : i32
    %c0_i32_1 = arith.constant 0 : i32
    return %c0_i32, %c0_i32_0 : i32, i32
  }
  func.func @transform_1(%arg0: i32) -> (i32, i32, i32) {
    %c0_i32 = arith.constant 0 : i32
    %c0_i32_0 = arith.constant 0 : i32
    %c0_i32_1 = arith.constant 0 : i32
    %c0_i32_2 = arith.constant 0 : i32
    return %c0_i32, %c0_i32_0, %c0_i32_1 : i32, i32, i32
  }
  func.func @transform_2(%arg0: i32) -> (i32, i32, i32) {
    %c0_i32 = arith.constant 0 : i32
    %c0_i32_0 = arith.constant 0 : i32
    %c0_i32_1 = arith.constant 0 : i32
    %c0_i32_2 = arith.constant 0 : i32
    return %c0_i32, %c0_i32_0, %c0_i32_1 : i32, i32, i32
  }
}

</mosaic_0001>

<llo_original>
// kernel: tpu_custom_call.1
$region0: #{tpu_custom_call.1}
  #allocation0 [shape = 'u32[]', space=smem, size = 0x4, offset = 0x4, fixed_abs, tag = 'smem constant byte address 0x4 - core index']
  #allocation1 [shape = 'u32[144,128]{1,0:T(1,128)}', space=vmem, size = 0x12000, scoped, tag = 'internal scratch']
  %s0 = inlined_call_operand.hbm [shape: f32[16,16], index: 0, kind: input, shape index: {}]
  %s1 = inlined_call_operand.hbm [shape: f32[2,16,32], index: 1, kind: input, shape index: {}]
  %s2 = inlined_call_operand.hbm [shape: f32[2,16,32], index: 2, kind: output, shape index: {}]
  %s3 = sld [smem:[#allocation0]]
  $region26: #{tpu_custom_call.1} parent=0
    _
  %s5 = ssub.s32 1, %s3
  %s6 = scalar_select 0, %s5, %s3
  $region1: #{tpu_custom_call.1} parent=0
    #allocation2 [shape = 'u8[8192]{0}', space=vmem, size = 0x2000, scoped, tag = 'input window, operand 0, single buffered']
    #allocation3 [shape = 's32[1]{0}', space=sflag, size = 0x4, scoped, tag = 'scoped memory for tpu_custom_call.1']
    #allocation4 [shape = 's32[1]{0}', space=sflag, size = 0x4, scoped, tag = 'scoped memory for tpu_custom_call.1']
    #allocation5 [shape = 'u8[16384]{0}', space=vmem, size = 0x4000, scoped, tag = 'input window, operand 1, single buffered']
    #allocation6 [shape = 's32[1]{0}', space=sflag, size = 0x4, scoped, tag = 'scoped memory for tpu_custom_call.1']
    #allocation7 [shape = 'u8[16384]{0}', space=vmem, size = 0x4000, scoped, tag = 'output window, operand 0, single buffered']
    %7 = vsyncpa [#allocation3], 0
    %8 = vsyncpa [#allocation6], 0
    %9 = vsyncpa [#allocation4], 0
    // Predicated region
    $region2: #{tpu_custom_call.1} parent=1 // pred_check
      _
    $region3: #{tpu_custom_call.1} parent=1 // pred_check_branch
      %11 = sbr.rel (0) target = $region5
    $region4: #{tpu_custom_call.1} parent=1 // pred_region
      %s13 = ssub.s32 256, 256
      %14 = vsyncadd [#allocation3], %s13
      %s15 = sshll.u32 [#allocation2], 4
      %s16 = int_to_ptr.vmem [resolvable:$true] %s15
      %21 = dma.hbm_to_vmem [thread:$0]  %s0, 256, %s16, [#allocation3], 128, 128, 8
    $region5: #{tpu_custom_call.1} parent=1 // pred_fallthru
      _
    // Predicated region
    $region6: #{tpu_custom_call.1} parent=1 // pred_check
      _
    $region7: #{tpu_custom_call.1} parent=1 // pred_check_branch
      %23 = sbr.rel (0) target = $region9
    $region8: #{tpu_custom_call.1} parent=1 // pred_region
      %s25 = ssub.s32 512, 512
      %26 = vsyncadd [#allocation6], %s25
      %s27 = sshll.u32 [#allocation5], 4
      %s28 = int_to_ptr.vmem [resolvable:$true] %s27
      %33 = dma.hbm_to_vmem [thread:$0]  %s1, 512, %s28, [#allocation6], 128, 128, 8
    $region9: #{tpu_custom_call.1} parent=1 // pred_fallthru
      _
    // Predicated region
    $region10: #{tpu_custom_call.1} parent=1 // pred_check
      _
    $region11: #{tpu_custom_call.1} parent=1 // pred_check_branch
      %35 = sbr.rel (0) target = $region13
    $region12: #{tpu_custom_call.1} parent=1 // pred_region
      %36 = dma.done [#allocation3], 256
    $region13: #{tpu_custom_call.1} parent=1 // pred_fallthru
      _
    // Predicated region
    $region14: #{tpu_custom_call.1} parent=1 // pred_check
      _
    $region15: #{tpu_custom_call.1} parent=1 // pred_check_branch
      %38 = sbr.rel (0) target = $region17
    $region16: #{tpu_custom_call.1} parent=1 // pred_region
      %39 = dma.done [#allocation6], 512
    $region17: #{tpu_custom_call.1} parent=1 // pred_fallthru
      _
    %v40 = vld [vmem:[#allocation2] sm:$0xff]
    %v41 = vld [vmem:[#allocation2 + $0x8] sm:$0xff]
    %v42 = vld [vmem:[#allocation5] sm:$0xff]
    %v43 = vld [vmem:[#allocation5 + $0x8] sm:$0xff]
    %vm44 = vcmask 130048
    %v46 = vsel %vm44, %v40, 0
    %v49 = vsel %vm44, %v41, 0
    %51 = vmatprep.subr.mxu0 0.0
    %52 = vmatpush1.msra.mxu0 %v42
    %53 = vmatprep.subr.mxu0 0.0
    %54 = vmatpush1.msra.mxu0 %v43
    %55 = vmatprep.subr.mxu0 0.0
    %56 = vmatpush1.msra.mxu0 0.0
    %57 = vmatprep.subr.mxu0 0.0
    %58 = vmatpush1.msra.mxu0 0.0
    %59 = vmatprep.subr.mxu0 0.0
    %60 = vmatpush1.msra.mxu0 0.0
    %61 = vmatprep.subr.mxu0 0.0
    %62 = vmatpush1.msra.mxu0 0.0
    %63 = vmatprep.subr.mxu0 0.0
    %64 = vmatpush1.msra.mxu0 0.0
    %65 = vmatprep.subr.mxu0 0.0
    %66 = vmatpush1.msra.mxu0 0.0
    %67 = vmatprep.subr.mxu0 0.0
    %68 = vmatpush1.msra.mxu0 0.0
    %69 = vmatprep.subr.mxu0 0.0
    %70 = vmatpush1.msra.mxu0 0.0
    %71 = vmatprep.subr.mxu0 0.0
    %72 = vmatpush1.msra.mxu0 0.0
    %73 = vmatprep.subr.mxu0 0.0
    %74 = vmatpush1.msra.mxu0 0.0
    %75 = vmatprep.subr.mxu0 0.0
    %76 = vmatpush1.msra.mxu0 0.0
    %77 = vmatprep.subr.mxu0 0.0
    %78 = vmatpush1.msra.mxu0 0.0
    %79 = vmatprep.subr.mxu0 0.0
    %80 = vmatpush1.msra.mxu0 0.0
    %81 = vmatprep.subr.mxu0 0.0
    %82 = vmatpush1.msra.mxu0 0.0
    %83 = vmatprep.subr.mxu0 0.0
    %84 = vmatpush1.msra.mxu0 0.0
    %85 = vmatprep.subr.mxu0 0.0
    %86 = vmatpush1.msra.mxu0 0.0
    %87 = vmatprep.subr.mxu0 0.0
    %88 = vmatpush1.msra.mxu0 0.0
    %89 = vmatprep.subr.mxu0 0.0
    %90 = vmatpush1.msra.mxu0 0.0
    %91 = vmatprep.subr.mxu0 0.0
    %92 = vmatpush1.msra.mxu0 0.0
    %93 = vmatprep.subr.mxu0 0.0
    %94 = vmatpush1.msra.mxu0 0.0
    %95 = vmatprep.subr.mxu0 0.0
    %96 = vmatpush1.msra.mxu0 0.0
    %97 = vmatprep.subr.mxu0 0.0
    %98 = vmatpush1.msra.mxu0 0.0
    %99 = vmatprep.subr.mxu0 0.0
    %100 = vmatpush1.msra.mxu0 0.0
    %101 = vmatprep.subr.mxu0 0.0
    %102 = vmatpush1.msra.mxu0 0.0
    %103 = vmatprep.subr.mxu0 0.0
    %104 = vmatpush1.msra.mxu0 0.0
    %105 = vmatprep.subr.mxu0 0.0
    %106 = vmatpush1.msra.mxu0 0.0
    %107 = vmatprep.subr.mxu0 0.0
    %108 = vmatpush1.msra.mxu0 0.0
    %109 = vmatprep.subr.mxu0 0.0
    %110 = vmatpush1.msra.mxu0 0.0
    %111 = vmatprep.subr.mxu0 0.0
    %112 = vmatpush1.msra.mxu0 0.0
    %113 = vmatprep.subr.mxu0 0.0
    %114 = vmatpush1.msra.mxu0 0.0
    %115 = vmatprep.mubr.f32.mxu0 0.0
    %116 = vmatmul.mubr.f32.gmra.mrb[0].mxu0 %v46
    %v117 = vpop.f32.mrb[0].mxu0
    %v118 = vadd.f32 0.0, %v117
    %v119 = vpop.f32.mrb[0].mxu0
    %120 = vmatprep.mubr.f32.mxu0 0.0
    %121 = vmatmul.mubr.f32.gmra.mrb[0].mxu0 %v49
    %v122 = vpop.f32.mrb[0].mxu0
    %v123 = vadd.f32 0.0, %v122
    %v124 = vpop.f32.mrb[0].mxu0
    %125 = vdwg.mxu0
    %vm126 = vcmask 261120
    %127 = vst.msk [vmem:[#allocation7] sm:$0xff] %vm126, %v118
    %128 = vst.msk [vmem:[#allocation7 + $0x8] sm:$0xff] %vm126, %v123
    %s129 = scalar_lea.vmem [#allocation5], 16
    %v130 = vld [vmem:[%s129] sm:$0xff]
    %v131 = vld [vmem:[%s129 + $0x8] sm:$0xff]
    %132 = vmatprep.subr.mxu0 0.0
    %133 = vmatpush1.msra.mxu0 %v130
    %134 = vmatprep.subr.mxu0 0.0
    %135 = vmatpush1.msra.mxu0 %v131
    %136 = vmatprep.subr.mxu0 0.0
    %137 = vmatpush1.msra.mxu0 0.0
    %138 = vmatprep.subr.mxu0 0.0
    %139 = vmatpush1.msra.mxu0 0.0
    %140 = vmatprep.subr.mxu0 0.0
    %141 = vmatpush1.msra.mxu0 0.0
    %142 = vmatprep.subr.mxu0 0.0
    %143 = vmatpush1.msra.mxu0 0.0
    %144 = vmatprep.subr.mxu0 0.0
    %145 = vmatpush1.msra.mxu0 0.0
    %146 = vmatprep.subr.mxu0 0.0
    %147 = vmatpush1.msra.mxu0 0.0
    %148 = vmatprep.subr.mxu0 0.0
    %149 = vmatpush1.msra.mxu0 0.0
    %150 = vmatprep.subr.mxu0 0.0
    %151 = vmatpush1.msra.mxu0 0.0
    %152 = vmatprep.subr.mxu0 0.0
    %153 = vmatpush1.msra.mxu0 0.0
    %154 = vmatprep.subr.mxu0 0.0
    %155 = vmatpush1.msra.mxu0 0.0
    %156 = vmatprep.subr.mxu0 0.0
    %157 = vmatpush1.msra.mxu0 0.0
    %158 = vmatprep.subr.mxu0 0.0
    %159 = vmatpush1.msra.mxu0 0.0
    %160 = vmatprep.subr.mxu0 0.0
    %161 = vmatpush1.msra.mxu0 0.0
    %162 = vmatprep.subr.mxu0 0.0
    %163 = vmatpush1.msra.mxu0 0.0
    %164 = vmatprep.subr.mxu0 0.0
    %165 = vmatpush1.msra.mxu0 0.0
    %166 = vmatprep.subr.mxu0 0.0
    %167 = vmatpush1.msra.mxu0 0.0
    %168 = vmatprep.subr.mxu0 0.0
    %169 = vmatpush1.msra.mxu0 0.0
    %170 = vmatprep.subr.mxu0 0.0
    %171 = vmatpush1.msra.mxu0 0.0
    %172 = vmatprep.subr.mxu0 0.0
    %173 = vmatpush1.msra.mxu0 0.0
    %174 = vmatprep.subr.mxu0 0.0
    %175 = vmatpush1.msra.mxu0 0.0
    %176 = vmatprep.subr.mxu0 0.0
    %177 = vmatpush1.msra.mxu0 0.0
    %178 = vmatprep.subr.mxu0 0.0
    %179 = vmatpush1.msra.mxu0 0.0
    %180 = vmatprep.subr.mxu0 0.0
    %181 = vmatpush1.msra.mxu0 0.0
    %182 = vmatprep.subr.mxu0 0.0
    %183 = vmatpush1.msra.mxu0 0.0
    %184 = vmatprep.subr.mxu0 0.0
    %185 = vmatpush1.msra.mxu0 0.0
    %186 = vmatprep.subr.mxu0 0.0
    %187 = vmatpush1.msra.mxu0 0.0
    %188 = vmatprep.subr.mxu0 0.0
    %189 = vmatpush1.msra.mxu0 0.0
    %190 = vmatprep.subr.mxu0 0.0
    %191 = vmatpush1.msra.mxu0 0.0
    %192 = vmatprep.subr.mxu0 0.0
    %193 = vmatpush1.msra.mxu0 0.0
    %194 = vmatprep.subr.mxu0 0.0
    %195 = vmatpush1.msra.mxu0 0.0
    %196 = vmatprep.mubr.f32.mxu0 0.0
    %197 = vmatmul.mubr.f32.gmra.mrb[0].mxu0 %v46
    %v198 = vpop.f32.mrb[0].mxu0
    %v199 = vadd.f32 0.0, %v198
    %v200 = vpop.f32.mrb[0].mxu0
    %201 = vmatprep.mubr.f32.mxu0 0.0
    %202 = vmatmul.mubr.f32.gmra.mrb[0].mxu0 %v49
    %v203 = vpop.f32.mrb[0].mxu0
    %v204 = vadd.f32 0.0, %v203
    %v205 = vpop.f32.mrb[0].mxu0
    %206 = vdwg.mxu0
    %s207 = scalar_lea.vmem [#allocation7], 16
    %208 = vst.msk [vmem:[%s207] sm:$0xff] %vm126, %v199
    %209 = vst.msk [vmem:[%s207 + $0x8] sm:$0xff] %vm126, %v204
    // Predicated region
    $region18: #{tpu_custom_call.1} parent=1 // pred_check
      _
    $region19: #{tpu_custom_call.1} parent=1 // pred_check_branch
      %211 = sbr.rel (0) target = $region21
    $region20: #{tpu_custom_call.1} parent=1 // pred_region
      %s213 = ssub.s32 512, 512
      %214 = vsyncadd [#allocation4], %s213
      %s215 = sshll.u32 [#allocation7], 4
      %s216 = int_to_ptr.vmem [resolvable:$true] %s215
      %221 = dma.vmem_to_hbm [thread:$0]  %s216, 512, %s2, [#allocation4], 128, 128, 8
    $region21: #{tpu_custom_call.1} parent=1 // pred_fallthru
      _
    // Predicated region
    $region22: #{tpu_custom_call.1} parent=1 // pred_check
      _
    $region23: #{tpu_custom_call.1} parent=1 // pred_check_branch
      %223 = sbr.rel (0) target = $region25
    $region24: #{tpu_custom_call.1} parent=1 // pred_region
      %224 = dma.done [#allocation4], 512
    $region25: #{tpu_custom_call.1} parent=1 // pred_fallthru
      _
    %225 = vsyncpa [#allocation3], 1
    %226 = vsyncpa [#allocation6], 1
    %227 = vsyncpa [#allocation4], 1

</llo_original>
